<compile_context>
chip_gen: v7x
topology: tpu7x:2x2x1
jax: 0.10.0
libtpu: 0.0.40
codegen_flags: <defaults>
</compile_context>

<pallas_src>
import jax
import jax.numpy as jnp
from jax.experimental import pallas as pl
from jax.experimental.pallas import tpu as pltpu


def ws_readout_kernel(seq_ref, query_ref, out_ref):
    # seq_ref:   (TB, N, D)
    # query_ref: (TB, 1, D)
    # out_ref:   (TB, D)
    s = seq_ref[...]                                   # (TB, N, D)
    q = query_ref[...]                                 # (TB, 1, D)

    # scores[b, n] = sum_d s[b, n, d] * q[b, 0, d]   (VPU mul + lane reduce)
    scores = jnp.sum(s * q, axis=-1, keepdims=True)    # (TB, N, 1)

    # softmax over the sequence axis N (dim=1 of the original (B, N, 1))
    m = jnp.max(scores, axis=1, keepdims=True)         # (TB, 1, 1)
    p = jnp.exp(scores - m)                            # (TB, N, 1)
    w = p / jnp.sum(p, axis=1, keepdims=True)          # (TB, N, 1)

    # out[b, d] = sum_n w[b, n] * s[b, n, d]          (VPU mul + sublane reduce)
    out = jnp.sum(w * s, axis=1)                       # (TB, D)
    out_ref[...] = out.astype(out_ref.dtype)


def _choose_tb(B, N, D, itemsize, seq_budget_bytes=16 * 1024 * 1024):
    """Pick batches-per-step so the double-buffered seq slab fits the budget."""
    per_batch = 2 * N * D * itemsize                   # double-buffered seq bytes
    tb = max(1, seq_budget_bytes // per_batch)
    tb = int(min(tb, B))
    if tb >= 8:
        tb = (tb // 8) * 8                             # dense (8,128) output tiles
    return tb


def ws_readout(seq, query):
    """seq: (B, N, D) float32, query: (B, 1, D) float32 -> (B, D) float32."""
    B, N, D = seq.shape
    assert query.shape == (B, 1, D)

    itemsize = jnp.dtype(seq.dtype).itemsize
    tb = _choose_tb(B, N, D, itemsize)

    # Pad batch to a multiple of TB so every block is in-bounds (padded rows
    # compute garbage-free zeros and are sliced off below).
    Bp = pl.cdiv(B, tb) * tb
    if Bp != B:
        pad = Bp - B
        seq = jnp.pad(seq, ((0, pad), (0, 0), (0, 0)))
        query = jnp.pad(query, ((0, pad), (0, 0), (0, 0)))

    grid = (Bp // tb,)

    out = pl.pallas_call(
        ws_readout_kernel,
        out_shape=jax.ShapeDtypeStruct((Bp, D), seq.dtype),
        grid=grid,
        in_specs=[
            pl.BlockSpec((tb, N, D), lambda b: (b, 0, 0)),
            pl.BlockSpec((tb, 1, D), lambda b: (b, 0, 0)),
        ],
        out_specs=pl.BlockSpec((tb, D), lambda b: (b, 0)),
        compiler_params=pltpu.CompilerParams(
            dimension_semantics=("parallel",),
            vmem_limit_bytes=32 * 1024 * 1024,
        ),
    )(seq, query)

    if Bp != B:
        out = out[:B]
    return out


def ws_readout_ref(seq, query):
    """Pure-JAX reference matching the PyTorch forward exactly."""
    qt = jnp.transpose(query, (0, 2, 1))              # (B, D, 1)
    sim = jnp.matmul(seq, qt)                         # (B, N, 1)
    sim = jax.nn.softmax(sim, axis=1)                 # softmax over N
    sim = jnp.tile(sim, (1, 1, seq.shape[-1]))        # repeat(1, 1, 128)
    out = seq * sim
    return jnp.sum(out, axis=1)                       # (B, D)


if __name__ == "__main__":
    B, N, D = 2, 8, 128   # D must be 128 (hardcoded repeat in the module)
    key = jax.random.PRNGKey(0)
    k_seq, k_query = jax.random.split(key)
    seq = jax.random.normal(k_seq, (B, N, D), dtype=jnp.float32)
    query = jax.random.normal(k_query, (B, 1, D), dtype=jnp.float32)

    out = ws_readout(seq, query)
    out = jax.block_until_ready(out)

    ref = jax.block_until_ready(ws_readout_ref(seq, query))
    assert out.shape == (B, D)
    assert jnp.allclose(out, ref, atol=1e-5, rtol=1e-5), "mismatch vs reference"

    print("KERNEL_OK")
</pallas_src>

<mosaic_0001>
module attributes {stable_mosaic.version = 11 : i64} {
  func.func @ws_readout_kernel(%arg0: i32, %arg1: memref<2x8x128xf32, #tpu.memory_space<vmem>>, %arg2: memref<2x1x128xf32, #tpu.memory_space<vmem>>, %arg3: memref<2x128xf32, #tpu.memory_space<vmem>>) attributes {dimension_semantics = [#tpu.dimension_semantics<parallel>], iteration_bounds = array<i64: 1>, scalar_prefetch = 0 : i64, scratch_operands = 0 : i64, tpu.core_type = #tpu.core_type<tc>, window_params = [{transform_indices = @transform_0, window_bounds = array<i64: 2, 8, 128>}, {transform_indices = @transform_1, window_bounds = array<i64: 2, 1, 128>}, {transform_indices = @transform_2, window_bounds = array<i64: 2, 128>}]} {
    %c0 = arith.constant 0 : index
    %c0_0 = arith.constant 0 : index
    %c0_1 = arith.constant 0 : index
    %0 = vector.load %arg1[%c0, %c0_0, %c0_1] : memref<2x8x128xf32, #tpu.memory_space<vmem>>, vector<2x8x128xf32>
    %c0_2 = arith.constant 0 : index
    %c0_3 = arith.constant 0 : index
    %c0_4 = arith.constant 0 : index
    %1 = vector.load %arg2[%c0_2, %c0_3, %c0_4] : memref<2x1x128xf32, #tpu.memory_space<vmem>>, vector<2x1x128xf32>
    %2 = vector.broadcast %1 : vector<2x1x128xf32> to vector<2x8x128xf32>
    %3 = arith.mulf %0, %2 : vector<2x8x128xf32>
    %cst = arith.constant dense<0.000000e+00> : vector<2x8xf32>
    %4 = vector.multi_reduction <add>, %3, %cst [2] : vector<2x8x128xf32> to vector<2x8xf32>
    %5 = vector.shape_cast %4 : vector<2x8xf32> to vector<2x8x1xf32>
    %cst_5 = arith.constant dense<0xFF800000> : vector<2x1xf32>
    %6 = vector.multi_reduction <maximumf>, %5, %cst_5 [1] : vector<2x8x1xf32> to vector<2x1xf32>
    %7 = vector.shape_cast %6 : vector<2x1xf32> to vector<2x1x1xf32>
    %8 = vector.broadcast %7 : vector<2x1x1xf32> to vector<2x8x1xf32>
    %9 = arith.subf %5, %8 : vector<2x8x1xf32>
    %10 = math.exp %9 : vector<2x8x1xf32>
    %cst_6 = arith.constant dense<0.000000e+00> : vector<2x1xf32>
    %11 = vector.multi_reduction <add>, %10, %cst_6 [1] : vector<2x8x1xf32> to vector<2x1xf32>
    %12 = vector.shape_cast %11 : vector<2x1xf32> to vector<2x1x1xf32>
    %13 = vector.broadcast %12 : vector<2x1x1xf32> to vector<2x8x1xf32>
    %14 = arith.divf %10, %13 : vector<2x8x1xf32>
    %15 = vector.broadcast %14 : vector<2x8x1xf32> to vector<2x8x128xf32>
    %16 = arith.mulf %15, %0 : vector<2x8x128xf32>
    %cst_7 = arith.constant dense<0.000000e+00> : vector<2x128xf32>
    %17 = vector.multi_reduction <add>, %16, %cst_7 [1] : vector<2x8x128xf32> to vector<2x128xf32>
    %c0_8 = arith.constant 0 : index
    %c0_9 = arith.constant 0 : index
    %18 = vector.load %arg3[%c0_8, %c0_9] : memref<2x128xf32, #tpu.memory_space<vmem>>, vector<2x128xf32>
    tpu.vector_store %arg3[%c0_8, %c0_9], %17 {strides = array<i32>} : memref<2x128xf32, #tpu.memory_space<vmem>>, vector<2x128xf32>,
    return
  }
  func.func @transform_0(%arg0: i32) -> (i32, i32, i32) {
    %c0_i32 = arith.constant 0 : i32
    %c0_i32_0 = arith.constant 0 : i32
    %c0_i32_1 = arith.constant 0 : i32
    return %arg0, %c0_i32, %c0_i32_0 : i32, i32, i32
  }
  func.func @transform_1(%arg0: i32) -> (i32, i32, i32) {
    %c0_i32 = arith.constant 0 : i32
    %c0_i32_0 = arith.constant 0 : i32
    %c0_i32_1 = arith.constant 0 : i32
    return %arg0, %c0_i32, %c0_i32_0 : i32, i32, i32
  }
  func.func @transform_2(%arg0: i32) -> (i32, i32) {
    %c0_i32 = arith.constant 0 : i32
    %c0_i32_0 = arith.constant 0 : i32
    return %arg0, %c0_i32 : i32, i32
  }
}

</mosaic_0001>

<llo_original>
// kernel: tpu_custom_call.1
$region0: #{tpu_custom_call.1}
  #allocation0 [shape = 'u32[]', space=smem, size = 0x4, offset = 0x4, fixed_abs, tag = 'smem constant byte address 0x4 - core index']
  #allocation1 [shape = 'u32[144,128]{1,0:T(1,128)}', space=vmem, size = 0x12000, scoped, tag = 'internal scratch']
  %s0 = inlined_call_operand.hbm [shape: f32[2,8,128], index: 0, kind: input, shape index: {}]
  %s1 = inlined_call_operand.vmem [shape: f32[2,1,128], index: 1, kind: input, shape index: {}]
  %s2 = inlined_call_operand.hbm [shape: f32[2,128], index: 2, kind: output, shape index: {}]
  %s3 = sld [smem:[#allocation0]]
  $region22: #{tpu_custom_call.1} parent=0
    _
  %s5 = ssub.s32 1, %s3
  %s6 = scalar_select 0, %s5, %s3
  $region1: #{tpu_custom_call.1} parent=0
    #allocation2 [shape = 'u8[8192]{0}', space=vmem, size = 0x2000, scoped, tag = 'input window, operand 0, single buffered']
    #allocation3 [shape = 's32[1]{0}', space=sflag, size = 0x4, scoped, tag = 'scoped memory for tpu_custom_call.1']
    #allocation4 [shape = 's32[1]{0}', space=sflag, size = 0x4, scoped, tag = 'scoped memory for tpu_custom_call.1']
    #allocation5 [shape = 'u8[1024]{0}', space=vmem, size = 0x400, scoped, tag = 'output window, operand 0, single buffered']
    %7 = vsyncpa [#allocation3], 0
    %8 = vsyncpa [#allocation4], 0
    // Predicated region
    $region2: #{tpu_custom_call.1} parent=1 // pred_check
      _
    $region3: #{tpu_custom_call.1} parent=1 // pred_check_branch
      %10 = sbr.rel (0) target = $region5
    $region4: #{tpu_custom_call.1} parent=1 // pred_region
      %s12 = ssub.s32 256, 256
      %13 = vsyncadd [#allocation3], %s12
      %s14 = sshll.u32 [#allocation2], 4
      %s15 = int_to_ptr.vmem [resolvable:$true] %s14
      %20 = dma.hbm_to_vmem [thread:$0]  %s0, 256, %s15, [#allocation3], 128, 128, 8
    $region5: #{tpu_custom_call.1} parent=1 // pred_fallthru
      _
    // Predicated region
    $region6: #{tpu_custom_call.1} parent=1 // pred_check
      _
    $region7: #{tpu_custom_call.1} parent=1 // pred_check_branch
      %22 = sbr.rel (0) target = $region9
    $region8: #{tpu_custom_call.1} parent=1 // pred_region
      _
    $region9: #{tpu_custom_call.1} parent=1 // pred_fallthru
      _
    // Predicated region
    $region10: #{tpu_custom_call.1} parent=1 // pred_check
      _
    $region11: #{tpu_custom_call.1} parent=1 // pred_check_branch
      %24 = sbr.rel (0) target = $region13
    $region12: #{tpu_custom_call.1} parent=1 // pred_region
      %25 = dma.done [#allocation3], 256
    $region13: #{tpu_custom_call.1} parent=1 // pred_fallthru
      _
    %v26 = vld [vmem:[#allocation2] sm:$0xff]
    %v27 = vld [vmem:[#allocation2 + $0x8] sm:$0xff]
    %v28 = vld [vmem:[%s1] sm:$0x1]
    %v29 = vld [vmem:[%s1 + $0x1] sm:$0x1]
    %v32 = vlaneseq
    %v33 = vshrl.u32 %v32, 7
    %v34 = vsub.s32 0, %v33
    %v35 = vrot.slane %v28, %v34
    %v36 = vlaneseq
    %v37 = vshrl.u32 %v36, 7
    %v38 = vsub.s32 0, %v37
    %v39 = vrot.slane %v29, %v38
    %v42 = vmul.f32 %v26, %v35
    %v43 = vmul.f32 %v27, %v39
    %44 = vadd.xlane.f32.xlu0 %v42
    %v45 = vpop.xlane.xlu0 %44
    %46 = vadd.xlane.f32.xlu0 %v43
    %v47 = vpop.xlane.xlu0 %46
    %v48 = vrot.slane %v45, 4
    %v49 = vmax.f32 %v45, %v48
    %v50 = vrot.slane %v49, 2
    %v51 = vmax.f32 %v49, %v50
    %v52 = vrot.slane %v51, 1
    %v53 = vmax.f32 %v51, %v52
    %v54 = vrot.slane %v47, 4
    %v55 = vmax.f32 %v47, %v54
    %v56 = vrot.slane %v55, 2
    %v57 = vmax.f32 %v55, %v56
    %v58 = vrot.slane %v57, 1
    %v59 = vmax.f32 %v57, %v58
    %v60 = vsub.f32 %v45, %v53
    %v61 = vsub.f32 %v47, %v59
    %v62 = vmul.f32 %v60, 1.442695
    %v63 = vpow.pop %v62
    %v64 = vmul.f32 %v61, 1.442695
    %v65 = vpow.pop %v64
    %v66 = vrot.slane %v63, 4
    %v67 = vadd.f32 %v63, %v66
    %v68 = vrot.slane %v67, 2
    %v69 = vadd.f32 %v67, %v68
    %v70 = vrot.slane %v69, 1
    %v71 = vadd.f32 %v69, %v70
    %v72 = vrot.slane %v65, 4
    %v73 = vadd.f32 %v65, %v72
    %v74 = vrot.slane %v73, 2
    %v75 = vadd.f32 %v73, %v74
    %v76 = vrot.slane %v75, 1
    %v77 = vadd.f32 %v75, %v76
    %v78 = vrcp.pop %v71
    %v79 = vmul.f32 %v63, %v78
    %v80 = vrcp.pop %v77
    %v81 = vmul.f32 %v65, %v80
    %v82 = vmul.f32 %v79, %v26
    %v83 = vmul.f32 %v81, %v27
    %v84 = vrot.slane %v82, 4
    %v85 = vadd.f32 %v82, %v84
    %v86 = vrot.slane %v85, 2
    %v87 = vadd.f32 %v85, %v86
    %v88 = vrot.slane %v87, 1
    %v89 = vadd.f32 %v87, %v88
    %v90 = vrot.slane %v83, 4
    %v91 = vadd.f32 %v83, %v90
    %v92 = vrot.slane %v91, 2
    %v93 = vadd.f32 %v91, %v92
    %v94 = vrot.slane %v93, 1
    %v95 = vadd.f32 %v93, %v94
    %vm98 = vcmask 1041409
    %v99 = vsel %vm98, %v95, %v89
    %101 = vst [vmem:[#allocation5] sm:$0x3] %v99
    // Predicated region
    $region14: #{tpu_custom_call.1} parent=1 // pred_check
      _
    $region15: #{tpu_custom_call.1} parent=1 // pred_check_branch
      %103 = sbr.rel (0) target = $region17
    $region16: #{tpu_custom_call.1} parent=1 // pred_region
      %s105 = ssub.s32 32, 32
      %106 = vsyncadd [#allocation4], %s105
      %s108 = sshll.u32 [#allocation5], 4
      %s109 = int_to_ptr.vmem [resolvable:$true] %s108
      %111 = dma.vmem_to_hbm [thread:$0]  %s109, 32, %s2, [#allocation4]
    $region17: #{tpu_custom_call.1} parent=1 // pred_fallthru
      _
    // Predicated region
    $region18: #{tpu_custom_call.1} parent=1 // pred_check
      _
    $region19: #{tpu_custom_call.1} parent=1 // pred_check_branch
      %113 = sbr.rel (0) target = $region21
    $region20: #{tpu_custom_call.1} parent=1 // pred_region
      %114 = dma.done [#allocation4], 32
    $region21: #{tpu_custom_call.1} parent=1 // pred_fallthru
      _
    %115 = vsyncpa [#allocation3], 1
    %116 = vsyncpa [#allocation4], 1

</llo_original>
